<compile_context>
chip_gen: v7x
topology: tpu7x:2x2x1
jax: 0.10.0
libtpu: 0.0.40
codegen_flags: <defaults>
</compile_context>

<pallas_src>
import functools
import math

import jax
import jax.numpy as jnp
from jax.experimental import pallas as pl
from jax.experimental.pallas import tpu as pltpu

_LANE = 128
_SUBL = 32  # row-tile alignment: keeps f32/bf16/int8/bool sublane packing tile-aligned


def _cdiv(a, b):
    return -(-a // b)


def _round_up(x, m):
    return ((x + m - 1) // m) * m


# ---------------------------------------------------------------------------
# Kernels. Input blocks are (TH, 128) (batch/chunk dims squeezed), outputs (8, 128).
# ---------------------------------------------------------------------------

def _mask_to_f32(m):
    if m.dtype == jnp.bool_:
        return jnp.where(m, 1.0, 0.0).astype(jnp.float32)
    return m.astype(jnp.float32)


def _sublane_fold(x):
    """(TH, 128) -> (8, 128) partial sum; pure VPU adds (layout-preserving reshape)."""
    th = x.shape[0]
    return jnp.sum(x.reshape(th // 8, 8, _LANE), axis=0)


def _l1_kernel_masked(pred_ref, target_ref, mask_ref, num_ref, den_ref, *, vmin, vmax):
    r = pl.program_id(2)

    @pl.when(r == 0)
    def _():
        num_ref[...] = jnp.zeros_like(num_ref)
        den_ref[...] = jnp.zeros_like(den_ref)

    p = jnp.clip(pred_ref[...].astype(jnp.float32), vmin, vmax)
    t = jnp.clip(target_ref[...].astype(jnp.float32), vmin, vmax)
    m = _mask_to_f32(mask_ref[...])

    num_ref[...] += _sublane_fold(jnp.abs(p - t) * m)
    den_ref[...] += _sublane_fold(m)


def _l1_kernel_nomask(pred_ref, target_ref, num_ref, *, vmin, vmax):
    r = pl.program_id(2)

    @pl.when(r == 0)
    def _():
        num_ref[...] = jnp.zeros_like(num_ref)

    p = jnp.clip(pred_ref[...].astype(jnp.float32), vmin, vmax)
    t = jnp.clip(target_ref[...].astype(jnp.float32), vmin, vmax)
    num_ref[...] += _sublane_fold(jnp.abs(p - t))


# ---------------------------------------------------------------------------
# Wrapper
# ---------------------------------------------------------------------------

def _choose_tiling(rows_needed, itemsize, batch):
    """Return (nc, n_inner, th): grid row split with minimal (ideally zero) padding."""
    # Target ~1 MiB per depth stream per pipeline buffer (2048 rows f32, 4096 rows bf16).
    max_th = max(_SUBL, (1 << 20) // (_LANE * itemsize))
    # Row-axis parallel chunks help v7x megacore balance when B alone can't (odd / ==1 B);
    # measured as a no-op on single-TC chips, so it is harmless there.
    nc = 2 if (batch % 2 == 1 and rows_needed >= 2 * _SUBL) else 1

    base = _round_up(max(nc, _cdiv(rows_needed, max_th)), nc)
    best = None
    for n_steps in range(base, base + 8 * nc, nc):
        th = _round_up(_cdiv(rows_needed, n_steps), _SUBL)
        pad = n_steps * th - rows_needed
        if best is None or pad < best[2]:
            best = (n_steps, th, pad)
        if pad == 0:
            break
    n_steps, th, _ = best
    return nc, n_steps // nc, th


def _to_lane_dense(x, rows):
    """(B, ...) -> (B, rows, 128) in native dtype; pads only if strictly necessary."""
    b = x.shape[0]
    flat = x.reshape(b, -1)
    total = flat.shape[1]
    padded = rows * _LANE
    if padded != total:
        # Rare with the adaptive tiling above; pads are neutral (diff==0, mask==False).
        flat = jnp.pad(flat, ((0, 0), (0, padded - total)))
    return flat.reshape(b, rows, _LANE)


def l1_metric(pred_depth, target_depth, valid_mask=None, *, vmin=0.0, vmax=10.0):
    """pred_depth, target_depth: (B, C, H, W). valid_mask: optional same-shape bool."""
    B = pred_depth.shape[0]
    n_pix = math.prod(int(d) for d in pred_depth.shape[1:])
    rows_needed = _cdiv(n_pix, _LANE)

    itemsize = jnp.dtype(pred_depth.dtype).itemsize
    nc, n_inner, th = _choose_tiling(rows_needed, itemsize, B)
    rows = nc * n_inner * th
    grid = (B, nc, n_inner)

    in_spec = pl.BlockSpec(
        (None, th, _LANE), lambda b, c, r: (b, c * n_inner + r, 0))
    out_spec = pl.BlockSpec(
        (None, None, 8, _LANE), lambda b, c, r: (b, c, 0, 0))
    cparams = pltpu.CompilerParams(
        dimension_semantics=("parallel", "parallel", "arbitrary"))

    pred3 = _to_lane_dense(pred_depth, rows)    # native dtype; cast in-kernel
    targ3 = _to_lane_dense(target_depth, rows)

    vmin = float(vmin)
    vmax = float(vmax)

    if valid_mask is None:
        num = pl.pallas_call(
            functools.partial(_l1_kernel_nomask, vmin=vmin, vmax=vmax),
            out_shape=jax.ShapeDtypeStruct((B, nc, 8, _LANE), jnp.float32),
            grid_spec=pltpu.PrefetchScalarGridSpec(
                num_scalar_prefetch=0,
                grid=grid,
                in_specs=[in_spec, in_spec],
                out_specs=out_spec,
            ),
            compiler_params=cparams,
        )(pred3, targ3)
        num_b = jnp.sum(num, axis=(1, 2, 3))                 # (B,)
        den_b = jnp.full((B,), float(n_pix), jnp.float32)    # all-ones mask sum
    else:
        mask3 = _to_lane_dense(valid_mask, rows)             # bool straight from HBM
        num, den = pl.pallas_call(
            functools.partial(_l1_kernel_masked, vmin=vmin, vmax=vmax),
            out_shape=(
                jax.ShapeDtypeStruct((B, nc, 8, _LANE), jnp.float32),
                jax.ShapeDtypeStruct((B, nc, 8, _LANE), jnp.float32),
            ),
            grid_spec=pltpu.PrefetchScalarGridSpec(
                num_scalar_prefetch=0,
                grid=grid,
                in_specs=[in_spec, in_spec, in_spec],
                out_specs=(out_spec, out_spec),
            ),
            compiler_params=cparams,
        )(pred3, targ3, mask3)
        num_b = jnp.sum(num, axis=(1, 2, 3))
        den_b = jnp.sum(den, axis=(1, 2, 3))

    # Final divide + mean over B in plain JAX (tiny). den_b == 0 -> NaN/Inf, as in ref.
    return jnp.mean(num_b / den_b)


def l1_forward(_output, _input, *, branch='src_depth', target='src_depth',
               vmin=0.0, vmax=10.0):
    """Mirrors L1.forward: dict-based interface."""
    if branch not in _output:
        return jnp.float32(0.0)
    mask = _input.get('src_valid', None)
    return l1_metric(_output[branch], _input[target], mask, vmin=vmin, vmax=vmax)


if __name__ == "__main__":
    key = jax.random.PRNGKey(0)
    B, H, W = 2, 16, 16
    k1, k2, k3 = jax.random.split(key, 3)

    pred = jax.random.uniform(k1, (B, 1, H, W), jnp.float32, minval=-1.0, maxval=12.0)
    targ = jax.random.uniform(k2, (B, 1, H, W), jnp.float32, minval=-1.0, maxval=12.0)
    valid = jax.random.uniform(k3, (B, 1, H, W), jnp.float32) > 0.3
    rgb = jnp.zeros((B, 3, H, W), jnp.float32)

    # Pure-JAX reference.
    p = jnp.clip(pred, 0.0, 10.0)
    t = jnp.clip(targ, 0.0, 10.0)
    m = valid.astype(jnp.float32)
    ref_masked = jnp.mean(
        jnp.sum(jnp.abs(p - t) * m, axis=(1, 2, 3)) / jnp.sum(m, axis=(1, 2, 3)))
    ref_nomask = jnp.mean(
        jnp.sum(jnp.abs(p - t), axis=(1, 2, 3)) / float(H * W))

    # Masked path.
    _output = {'src_depth': pred}
    _input = {'src_depth': targ, 'src_valid': valid, 'src_rgb': rgb}
    loss_masked = l1_forward(_output, _input)
    jax.block_until_ready(loss_masked)
    assert jnp.allclose(loss_masked, ref_masked, rtol=1e-4, atol=1e-5), (loss_masked, ref_masked)

    # Mask-free path (no 'src_valid' key): dedicated kernel variant.
    _input_nm = {'src_depth': targ, 'src_rgb': rgb}
    loss_nomask = l1_forward(_output, _input_nm)
    jax.block_until_ready(loss_nomask)
    assert jnp.allclose(loss_nomask, ref_nomask, rtol=1e-4, atol=1e-5), (loss_nomask, ref_nomask)

    # B=1 path: exercises the nc=2 row split (v7x megacore) and pad-free adaptive tiling.
    k4, k5, k6 = jax.random.split(jax.random.PRNGKey(1), 3)
    B1, H1, W1 = 1, 128, 128
    pred1 = jax.random.uniform(k4, (B1, 1, H1, W1), jnp.float32, minval=-1.0, maxval=12.0)
    targ1 = jax.random.uniform(k5, (B1, 1, H1, W1), jnp.float32, minval=-1.0, maxval=12.0)
    valid1 = jax.random.uniform(k6, (B1, 1, H1, W1), jnp.float32) > 0.5
    p1 = jnp.clip(pred1, 0.0, 10.0)
    t1 = jnp.clip(targ1, 0.0, 10.0)
    m1 = valid1.astype(jnp.float32)
    ref1 = jnp.mean(
        jnp.sum(jnp.abs(p1 - t1) * m1, axis=(1, 2, 3)) / jnp.sum(m1, axis=(1, 2, 3)))
    loss1 = l1_metric(pred1, targ1, valid1)
    jax.block_until_ready(loss1)
    assert jnp.allclose(loss1, ref1, rtol=1e-4, atol=1e-5), (loss1, ref1)

    # Missing-branch path returns 0.
    assert float(l1_forward({}, _input)) == 0.0

    print("KERNEL_OK")
</pallas_src>

<mosaic_0001>
module attributes {stable_mosaic.version = 11 : i64} {
  func.func @_l1_kernel_masked(%arg0: i32, %arg1: i32, %arg2: i32, %arg3: memref<1x32x128xf32, #tpu.memory_space<vmem>>, %arg4: memref<1x32x128xf32, #tpu.memory_space<vmem>>, %arg5: memref<1x32x128xi32, #tpu.memory_space<vmem>>, %arg6: memref<1x1x8x128xf32, #tpu.memory_space<vmem>>, %arg7: memref<1x1x8x128xf32, #tpu.memory_space<vmem>>) attributes {dimension_semantics = [#tpu.dimension_semantics<parallel>, #tpu.dimension_semantics<parallel>, #tpu.dimension_semantics<arbitrary>], iteration_bounds = array<i64: 2, 1, 1>, scalar_prefetch = 0 : i64, scratch_operands = 0 : i64, tpu.core_type = #tpu.core_type<tc>, window_params = [{transform_indices = @transform_0, window_bounds = array<i64: 1, 32, 128>}, {transform_indices = @transform_1, window_bounds = array<i64: 1, 32, 128>}, {transform_indices = @transform_2, window_bounds = array<i64: 1, 32, 128>}, {transform_indices = @transform_3, window_bounds = array<i64: 1, 1, 8, 128>}, {transform_indices = @transform_4, window_bounds = array<i64: 1, 1, 8, 128>}]} {
    %c0_i32 = arith.constant 0 : i32
    %0 = arith.cmpi eq, %arg2, %c0_i32 : i32
    %1 = arith.extui %0 : i1 to i32
    %c0_i32_0 = arith.constant 0 : i32
    %2 = arith.cmpi ne, %1, %c0_i32_0 : i32
    scf.if %2 {
      %cst_33 = arith.constant 0.000000e+00 : f32
      %40 = vector.broadcast %cst_33 : f32 to vector<8x128xf32>
      %c0_34 = arith.constant 0 : index
      %c0_35 = arith.constant 0 : index
      %c0_36 = arith.constant 0 : index
      %c0_37 = arith.constant 0 : index
      %41 = vector.load %arg6[%c0_34, %c0_35, %c0_36, %c0_37] : memref<1x1x8x128xf32, #tpu.memory_space<vmem>>, vector<1x1x8x128xf32>
      %42 = vector.shape_cast %41 : vector<1x1x8x128xf32> to vector<8x128xf32>
      %43 = vector.shape_cast %40 : vector<8x128xf32> to vector<1x1x8x128xf32>
      tpu.vector_store %arg6[%c0_34, %c0_35, %c0_36, %c0_37], %43 {strides = array<i32>} : memref<1x1x8x128xf32, #tpu.memory_space<vmem>>, vector<1x1x8x128xf32>,
      %cst_38 = arith.constant 0.000000e+00 : f32
      %44 = vector.broadcast %cst_38 : f32 to vector<8x128xf32>
      %c0_39 = arith.constant 0 : index
      %c0_40 = arith.constant 0 : index
      %c0_41 = arith.constant 0 : index
      %c0_42 = arith.constant 0 : index
      %45 = vector.load %arg7[%c0_39, %c0_40, %c0_41, %c0_42] : memref<1x1x8x128xf32, #tpu.memory_space<vmem>>, vector<1x1x8x128xf32>
      %46 = vector.shape_cast %45 : vector<1x1x8x128xf32> to vector<8x128xf32>
      %47 = vector.shape_cast %44 : vector<8x128xf32> to vector<1x1x8x128xf32>
      tpu.vector_store %arg7[%c0_39, %c0_40, %c0_41, %c0_42], %47 {strides = array<i32>} : memref<1x1x8x128xf32, #tpu.memory_space<vmem>>, vector<1x1x8x128xf32>,
    } else {
    }
    %c0 = arith.constant 0 : index
    %c0_1 = arith.constant 0 : index
    %c0_2 = arith.constant 0 : index
    %3 = vector.load %arg3[%c0, %c0_1, %c0_2] : memref<1x32x128xf32, #tpu.memory_space<vmem>>, vector<1x32x128xf32>
    %4 = vector.shape_cast %3 : vector<1x32x128xf32> to vector<32x128xf32>
    %cst = arith.constant 0.000000e+00 : f32
    %cst_3 = arith.constant 1.000000e+01 : f32
    %5 = vector.broadcast %cst : f32 to vector<32x128xf32>
    %6 = arith.maximumf %5, %4 : vector<32x128xf32>
    %7 = vector.broadcast %cst_3 : f32 to vector<32x128xf32>
    %8 = arith.minimumf %7, %6 : vector<32x128xf32>
    %c0_4 = arith.constant 0 : index
    %c0_5 = arith.constant 0 : index
    %c0_6 = arith.constant 0 : index
    %9 = vector.load %arg4[%c0_4, %c0_5, %c0_6] : memref<1x32x128xf32, #tpu.memory_space<vmem>>, vector<1x32x128xf32>
    %10 = vector.shape_cast %9 : vector<1x32x128xf32> to vector<32x128xf32>
    %cst_7 = arith.constant 0.000000e+00 : f32
    %cst_8 = arith.constant 1.000000e+01 : f32
    %11 = vector.broadcast %cst_7 : f32 to vector<32x128xf32>
    %12 = arith.maximumf %11, %10 : vector<32x128xf32>
    %13 = vector.broadcast %cst_8 : f32 to vector<32x128xf32>
    %14 = arith.minimumf %13, %12 : vector<32x128xf32>
    %c0_9 = arith.constant 0 : index
    %c0_10 = arith.constant 0 : index
    %c0_11 = arith.constant 0 : index
    %15 = vector.load %arg5[%c0_9, %c0_10, %c0_11] : memref<1x32x128xi32, #tpu.memory_space<vmem>>, vector<1x32x128xi32>
    %16 = vector.shape_cast %15 : vector<1x32x128xi32> to vector<32x128xi32>
    %cst_12 = arith.constant dense<0> : vector<32x128xi32>
    %17 = arith.cmpi ne, %16, %cst_12 : vector<32x128xi32>
    %cst_13 = arith.constant 1.000000e+00 : f32
    %cst_14 = arith.constant 0.000000e+00 : f32
    %18 = vector.broadcast %cst_13 : f32 to vector<32x128xf32>
    %19 = vector.broadcast %cst_14 : f32 to vector<32x128xf32>
    %20 = arith.select %17, %18, %19 : vector<32x128xi1>, vector<32x128xf32>
    %c0_15 = arith.constant 0 : index
    %c0_16 = arith.constant 0 : index
    %c0_17 = arith.constant 0 : index
    %c0_18 = arith.constant 0 : index
    %21 = vector.load %arg6[%c0_15, %c0_16, %c0_17, %c0_18] : memref<1x1x8x128xf32, #tpu.memory_space<vmem>>, vector<1x1x8x128xf32>
    %22 = vector.shape_cast %21 : vector<1x1x8x128xf32> to vector<8x128xf32>
    %23 = arith.subf %8, %14 : vector<32x128xf32>
    %24 = math.absf %23 : vector<32x128xf32>
    %25 = arith.mulf %24, %20 : vector<32x128xf32>
    %26 = vector.shape_cast %25 : vector<32x128xf32> to vector<4x8x128xf32>
    %cst_19 = arith.constant dense<0.000000e+00> : vector<8x128xf32>
    %27 = vector.multi_reduction <add>, %26, %cst_19 [0] : vector<4x8x128xf32> to vector<8x128xf32>
    %28 = arith.addf %22, %27 : vector<8x128xf32>
    %c0_20 = arith.constant 0 : index
    %c0_21 = arith.constant 0 : index
    %c0_22 = arith.constant 0 : index
    %c0_23 = arith.constant 0 : index
    %29 = vector.load %arg6[%c0_20, %c0_21, %c0_22, %c0_23] : memref<1x1x8x128xf32, #tpu.memory_space<vmem>>, vector<1x1x8x128xf32>
    %30 = vector.shape_cast %29 : vector<1x1x8x128xf32> to vector<8x128xf32>
    %31 = vector.shape_cast %28 : vector<8x128xf32> to vector<1x1x8x128xf32>
    tpu.vector_store %arg6[%c0_20, %c0_21, %c0_22, %c0_23], %31 {strides = array<i32>} : memref<1x1x8x128xf32, #tpu.memory_space<vmem>>, vector<1x1x8x128xf32>,
    %c0_24 = arith.constant 0 : index
    %c0_25 = arith.constant 0 : index
    %c0_26 = arith.constant 0 : index
    %c0_27 = arith.constant 0 : index
    %32 = vector.load %arg7[%c0_24, %c0_25, %c0_26, %c0_27] : memref<1x1x8x128xf32, #tpu.memory_space<vmem>>, vector<1x1x8x128xf32>
    %33 = vector.shape_cast %32 : vector<1x1x8x128xf32> to vector<8x128xf32>
    %34 = vector.shape_cast %20 : vector<32x128xf32> to vector<4x8x128xf32>
    %cst_28 = arith.constant dense<0.000000e+00> : vector<8x128xf32>
    %35 = vector.multi_reduction <add>, %34, %cst_28 [0] : vector<4x8x128xf32> to vector<8x128xf32>
    %36 = arith.addf %33, %35 : vector<8x128xf32>
    %c0_29 = arith.constant 0 : index
    %c0_30 = arith.constant 0 : index
    %c0_31 = arith.constant 0 : index
    %c0_32 = arith.constant 0 : index
    %37 = vector.load %arg7[%c0_29, %c0_30, %c0_31, %c0_32] : memref<1x1x8x128xf32, #tpu.memory_space<vmem>>, vector<1x1x8x128xf32>
    %38 = vector.shape_cast %37 : vector<1x1x8x128xf32> to vector<8x128xf32>
    %39 = vector.shape_cast %36 : vector<8x128xf32> to vector<1x1x8x128xf32>
    tpu.vector_store %arg7[%c0_29, %c0_30, %c0_31, %c0_32], %39 {strides = array<i32>} : memref<1x1x8x128xf32, #tpu.memory_space<vmem>>, vector<1x1x8x128xf32>,
    return
  }
  func.func @transform_0(%arg0: i32, %arg1: i32, %arg2: i32) -> (i32, i32, i32) {
    %c1_i32 = arith.constant 1 : i32
    %0 = arith.muli %arg1, %c1_i32 : i32
    %1 = arith.addi %0, %arg2 : i32
    %c0_i32 = arith.constant 0 : i32
    %c0_i32_0 = arith.constant 0 : i32
    return %arg0, %1, %c0_i32 : i32, i32, i32
  }
  func.func @transform_1(%arg0: i32, %arg1: i32, %arg2: i32) -> (i32, i32, i32) {
    %c1_i32 = arith.constant 1 : i32
    %0 = arith.muli %arg1, %c1_i32 : i32
    %1 = arith.addi %0, %arg2 : i32
    %c0_i32 = arith.constant 0 : i32
    %c0_i32_0 = arith.constant 0 : i32
    return %arg0, %1, %c0_i32 : i32, i32, i32
  }
  func.func @transform_2(%arg0: i32, %arg1: i32, %arg2: i32) -> (i32, i32, i32) {
    %c1_i32 = arith.constant 1 : i32
    %0 = arith.muli %arg1, %c1_i32 : i32
    %1 = arith.addi %0, %arg2 : i32
    %c0_i32 = arith.constant 0 : i32
    %c0_i32_0 = arith.constant 0 : i32
    return %arg0, %1, %c0_i32 : i32, i32, i32
  }
  func.func @transform_3(%arg0: i32, %arg1: i32, %arg2: i32) -> (i32, i32, i32, i32) {
    %c0_i32 = arith.constant 0 : i32
    %c0_i32_0 = arith.constant 0 : i32
    %c0_i32_1 = arith.constant 0 : i32
    return %arg0, %arg1, %c0_i32, %c0_i32_0 : i32, i32, i32, i32
  }
  func.func @transform_4(%arg0: i32, %arg1: i32, %arg2: i32) -> (i32, i32, i32, i32) {
    %c0_i32 = arith.constant 0 : i32
    %c0_i32_0 = arith.constant 0 : i32
    %c0_i32_1 = arith.constant 0 : i32
    return %arg0, %arg1, %c0_i32, %c0_i32_0 : i32, i32, i32, i32
  }
}

</mosaic_0001>

<llo_original>
// kernel: tpu_custom_call.1
$region0: #{tpu_custom_call.1}
  #allocation0 [shape = 'u32[]', space=smem, size = 0x4, offset = 0x4, fixed_abs, tag = 'smem constant byte address 0x4 - core index']
  #allocation1 [shape = 'u32[144,128]{1,0:T(1,128)}', space=vmem, size = 0x12000, scoped, tag = 'internal scratch']
  %s0 = inlined_call_operand.vmem [shape: f32[2,32,128], index: 0, kind: input, shape index: {}]
  %s1 = inlined_call_operand.hbm [shape: f32[2,32,128], index: 1, kind: input, shape index: {}]
  %s2 = inlined_call_operand.vmem [shape: s32[2,32,128], index: 2, kind: input, shape index: {}]
  %s3 = inlined_call_operand.hbm [shape: f32[2,1,8,128], index: 3, kind: output, shape index: {0}]
  %s4 = inlined_call_operand.hbm [shape: f32[2,1,8,128], index: 4, kind: output, shape index: {1}]
  %5 = xla_tuple %s3, %s4
  %s6 = sld [smem:[#allocation0]]
  $region61: #{tpu_custom_call.1} parent=0
    _
  %s8 = ssub.s32 1, %s6
  %s9 = scalar_select 0, %s8, %s6
  $region1: #{tpu_custom_call.1} parent=0
    #allocation2 [shape = 'u8[32768]{0}', space=vmem, size = 0x8000, scoped, tag = 'input window, operand 1']
    #allocation3 [shape = 's32[2]{0}', space=sflag, size = 0x8, scoped, tag = 'scoped memory for tpu_custom_call.1']
    #allocation4 [shape = 's32[2]{0}', space=sflag, size = 0x8, scoped, tag = 'scoped memory for tpu_custom_call.1']
    #allocation5 [shape = 'u8[8192]{0}', space=vmem, size = 0x2000, scoped, tag = 'output window, operand 0']
    #allocation6 [shape = 'u8[8192]{0}', space=vmem, size = 0x2000, scoped, tag = 'output window, operand 1']
    #allocation7 [shape = 's32[2]{0}', space=sflag, size = 0x8, scoped, tag = 'scoped memory for tpu_custom_call.1']
    %10 = vsyncpa [#allocation3], 0
    %s11 = scalar_lea.sflag [#allocation3], 1
    %12 = vsyncpa %s11, 0
    %13 = vsyncpa [#allocation4], 0
    %s14 = scalar_lea.sflag [#allocation4], 1
    %15 = vsyncpa %s14, 0
    %16 = vsyncpa [#allocation7], 0
    %s17 = scalar_lea.sflag [#allocation7], 1
    %18 = vsyncpa %s17, 0
    loop: start=0, step=1, limit=4
    $region2: #{tpu_custom_call.1} parent=1 // loop_pre_header
      _
    $region3: #{tpu_custom_call.1} parent=1 // loop_header
      %s20 = sphi 0, %s24
      %p21 = scmp.ge.s32.totalorder %s20, 4
      %s27 = sphi 0, %s46
      %s28 = sphi 0, %s42
      %s29 = sphi 0, %s38
      %s30 = sphi 0, %s27
      %s31 = sphi 0, %s28
      %s32 = sphi 0, %s29
      %s33 = sphi 0, %s30
      %s34 = sphi 0, %s31
      %s35 = sphi 0, %s32
      %s53 = sphi 0, %s55
      %s56 = sphi 0, %s53
      %s57 = sphi 0, %s56
      %s73 = sphi 0, %s57
      %s83 = sphi 0, %s85
      %s86 = sphi 0, %s83
      %s87 = sphi 0, %s86
      %s103 = sphi 0, %s87
      %s113 = sphi 0, %s115
      %s116 = sphi 0, %s113
      %s117 = sphi 0, %s116
      %s133 = sphi 0, %s117
      %s141 = sphi 0, %s143
      %s144 = sphi 0, %s141
      %s145 = sphi 0, %s144
      %s161 = sphi 0, %s145
      %s169 = sphi 0, %s171
      %s172 = sphi 0, %s169
      %s173 = sphi 0, %s172
      %s189 = sphi 0, %s173
    $region4: #{tpu_custom_call.1} parent=1 // loop_header_branch
      %23 = sbr.rel (%p21) target = $region8
    $region5: #{tpu_custom_call.1} parent=1 // loop_body
      %s25 = ssub.s32 %s20, 1
      %s26 = ssub.s32 %s20, 2
      %s36 = sadd.s32 1, %s29
      %p37 = scmp.ge.s32.totalorder %s36, 1
      %s38 = scalar_select %p37, 0, %s36
      %s39 = sadd.s32 1, %s28
      %s40 = scalar_select %p37, %s39, %s28
      %p41 = scmp.ge.s32.totalorder %s40, 1
      %s42 = scalar_select %p41, 0, %s40
      %s43 = sadd.s32 1, %s27
      %s44 = scalar_select %p41, %s43, %s27
      %p45 = scmp.ge.s32.totalorder %s44, 2
      %s46 = scalar_select %p45, 0, %s44
      %s47 = sadd.s32 %s28, %s29
      %s48 = sadd.s32 %s42, %s38
      %s49 = ssub.s32 %s27, %s46
      %s50 = ssub.s32 %s47, %s48
      %s51 = sor.u32 %s49, %s50
      %p52 = scmp.eq.s32.totalorder %s51, 0
      %s54 = sadd.s32 %s53, 1
      %s55 = scalar_select %p52, %s53, %s54
      %p58 = pneg %p52
      %p59 = scmp.eq.s32.totalorder %s20, 1
      %p60 = por %p58, %p59
      %p61 = scmp.ne.s32.totalorder %s53, %s56
      %p62 = scmp.eq.s32.totalorder %s20, 0
      %p63 = por %p61, %p62
      %p64 = scmp.ne.s32.totalorder %s53, %s56
      %p65 = scmp.eq.s32.totalorder %s25, 1
      %p66 = por %p64, %p65
      %p67 = scmp.ne.s32.totalorder %s56, %s57
      %p68 = scmp.eq.s32.totalorder %s25, 0
      %p69 = por %p67, %p68
      %p70 = scmp.ne.s32.totalorder %s56, %s57
      %p71 = scmp.eq.s32.totalorder %s26, 1
      %p72 = por %p70, %p71
      %p74 = scmp.ne.s32.totalorder %s57, %s73
      %p75 = scmp.eq.s32.totalorder %s26, 0
      %p76 = por %p74, %p75
      %s77 = sadd.s32 %s28, %s29
      %s78 = sadd.s32 %s42, %s38
      %s79 = ssub.s32 %s27, %s46
      %s80 = ssub.s32 %s77, %s78
      %s81 = sor.u32 %s79, %s80
      %p82 = scmp.eq.s32.totalorder %s81, 0
      %s84 = sadd.s32 %s83, 1
      %s85 = scalar_select %p82, %s83, %s84
      %p88 = pneg %p82
      %p89 = scmp.eq.s32.totalorder %s20, 1
      %p90 = por %p88, %p89
      %p91 = scmp.ne.s32.totalorder %s83, %s86
      %p92 = scmp.eq.s32.totalorder %s20, 0
      %p93 = por %p91, %p92
      %p94 = scmp.ne.s32.totalorder %s83, %s86
      %p95 = scmp.eq.s32.totalorder %s25, 1
      %p96 = por %p94, %p95
      %p97 = scmp.ne.s32.totalorder %s86, %s87
      %p98 = scmp.eq.s32.totalorder %s25, 0
      %p99 = por %p97, %p98
      %p100 = scmp.ne.s32.totalorder %s86, %s87
      %p101 = scmp.eq.s32.totalorder %s26, 1
      %p102 = por %p100, %p101
      %p104 = scmp.ne.s32.totalorder %s87, %s103
      %p105 = scmp.eq.s32.totalorder %s26, 0
      %p106 = por %p104, %p105
      %s107 = sadd.s32 %s28, %s29
      %s108 = sadd.s32 %s42, %s38
      %s109 = ssub.s32 %s27, %s46
      %s110 = ssub.s32 %s107, %s108
      %s111 = sor.u32 %s109, %s110
      %p112 = scmp.eq.s32.totalorder %s111, 0
      %s114 = sadd.s32 %s113, 1
      %s115 = scalar_select %p112, %s113, %s114
      %p118 = pneg %p112
      %p119 = scmp.eq.s32.totalorder %s20, 1
      %p120 = por %p118, %p119
      %p121 = scmp.ne.s32.totalorder %s113, %s116
      %p122 = scmp.eq.s32.totalorder %s20, 0
      %p123 = por %p121, %p122
      %p124 = scmp.ne.s32.totalorder %s113, %s116
      %p125 = scmp.eq.s32.totalorder %s25, 1
      %p126 = por %p124, %p125
      %p127 = scmp.ne.s32.totalorder %s116, %s117
      %p128 = scmp.eq.s32.totalorder %s25, 0
      %p129 = por %p127, %p128
      %p130 = scmp.ne.s32.totalorder %s116, %s117
      %p131 = scmp.eq.s32.totalorder %s26, 1
      %p132 = por %p130, %p131
      %p134 = scmp.ne.s32.totalorder %s117, %s133
      %p135 = scmp.eq.s32.totalorder %s26, 0
      %p136 = por %p134, %p135
      %s137 = ssub.s32 %s27, %s46
      %s138 = ssub.s32 %s28, %s42
      %s139 = sor.u32 %s137, %s138
      %p140 = scmp.eq.s32.totalorder %s139, 0
      %s142 = sadd.s32 %s141, 1
      %s143 = scalar_select %p140, %s141, %s142
      %p146 = pneg %p140
      %p147 = scmp.eq.s32.totalorder %s20, 1
      %p148 = por %p146, %p147
      %p149 = scmp.ne.s32.totalorder %s141, %s144
      %p150 = scmp.eq.s32.totalorder %s20, 0
      %p151 = por %p149, %p150
      %p152 = scmp.ne.s32.totalorder %s141, %s144
      %p153 = scmp.eq.s32.totalorder %s25, 1
      %p154 = por %p152, %p153
      %p155 = scmp.ne.s32.totalorder %s144, %s145
      %p156 = scmp.eq.s32.totalorder %s25, 0
      %p157 = por %p155, %p156
      %p158 = scmp.ne.s32.totalorder %s144, %s145
      %p159 = scmp.eq.s32.totalorder %s26, 1
      %p160 = por %p158, %p159
      %p162 = scmp.ne.s32.totalorder %s145, %s161
      %p163 = scmp.eq.s32.totalorder %s26, 0
      %p164 = por %p162, %p163
      %s165 = ssub.s32 %s27, %s46
      %s166 = ssub.s32 %s28, %s42
      %s167 = sor.u32 %s165, %s166
      %p168 = scmp.eq.s32.totalorder %s167, 0
      %s170 = sadd.s32 %s169, 1
      %s171 = scalar_select %p168, %s169, %s170
      %p174 = pneg %p168
      %p175 = scmp.eq.s32.totalorder %s20, 1
      %p176 = por %p174, %p175
      %p177 = scmp.ne.s32.totalorder %s169, %s172
      %p178 = scmp.eq.s32.totalorder %s20, 0
      %p179 = por %p177, %p178
      %p180 = scmp.ne.s32.totalorder %s169, %s172
      %p181 = scmp.eq.s32.totalorder %s25, 1
      %p182 = por %p180, %p181
      %p183 = scmp.ne.s32.totalorder %s172, %s173
      %p184 = scmp.eq.s32.totalorder %s25, 0
      %p185 = por %p183, %p184
      %p186 = scmp.ne.s32.totalorder %s172, %s173
      %p187 = scmp.eq.s32.totalorder %s26, 1
      %p188 = por %p186, %p187
      %p190 = scmp.ne.s32.totalorder %s173, %s189
      %p191 = scmp.eq.s32.totalorder %s26, 0
      %p192 = por %p190, %p191
      %p193 = scmp.le.s32.totalorder 1, %s20
      %p194 = scmp.lt.s32.totalorder %s20, 3
      %p195 = pnand %p193, %p194
      %p196 = pneg %p195
      // Predicated region
      $region9: #{tpu_custom_call.1} parent=5 // pred_check
        _
      $region10: #{tpu_custom_call.1} parent=5 // pred_check_branch
        %198 = sbr.rel (%p195) target = $region12
      $region11: #{tpu_custom_call.1} parent=5 // pred_region
        %s199 = ssub.s32 %s20, 1
      $region12: #{tpu_custom_call.1} parent=5 // pred_fallthru
        _
      %p200 = scmp.lt.s32.totalorder %s20, 2
      // Predicated region
      $region13: #{tpu_custom_call.1} parent=5 // pred_check
        %p201 = pneg %p200
      $region14: #{tpu_custom_call.1} parent=5 // pred_check_branch
        %203 = sbr.rel (%p201) target = $region16
      $region15: #{tpu_custom_call.1} parent=5 // pred_region
        // Predicated region
        $region17: #{tpu_custom_call.1} parent=15 // pred_check
          %p204 = pneg %p63
        $region18: #{tpu_custom_call.1} parent=15 // pred_check_branch
          %206 = sbr.rel (%p204) target = $region20
        $region19: #{tpu_custom_call.1} parent=15 // pred_region
          %s207 = sadd.s32 %s28, %s29
          %s208 = smul.u32 4, %s207
          %p209 = scmp.lt.s32.totalorder %s27, 1
          %s210 = scalar_select %p209, %s27, 1
          %p211 = scmp.lt.s32.totalorder %s208, 3
          %s212 = scalar_select %p211, %s208, 3
          %s213 = smul.addr %s210, 4
          %s214 = sadd.s32 %s212, %s213
          %s215 = smul.addr %s214, 8
          %s216 = scalar_lea.vmem %s0, %s215
          %s217 = sadd.s32 %s28, %s29
          %s218 = smul.u32 4, %s217
        $region20: #{tpu_custom_call.1} parent=15 // pred_fallthru
          _
        // Predicated region
        $region21: #{tpu_custom_call.1} parent=15 // pred_check
          %p219 = pneg %p93
        $region22: #{tpu_custom_call.1} parent=15 // pred_check_branch
          %221 = sbr.rel (%p219) target = $region24
        $region23: #{tpu_custom_call.1} parent=15 // pred_region
          %s222 = sand.u32 %s83, 1
          %s223 = scalar_lea.sflag [#allocation3], %s222
          %s224 = sand.u32 %s83, 1
          %s225 = smul.addr %s224, 32
          %s226 = scalar_lea.vmem [#allocation2], %s225
          %s227 = sadd.s32 %s28, %s29
          %s228 = smul.u32 4, %s227
          %s230 = ssub.s32 512, 512
          %231 = vsyncadd %s223, %s230
          %s232 = smul.addr %s27, 4
          %s233 = sadd.s32 %s228, %s232
          %s234 = smul.addr %s233, 128
          %s235 = scalar_lea.hbm %s1, %s234
          %s236 = sshll.u32 %s226, 4
          %s237 = int_to_ptr.vmem [resolvable:$true] %s236
          %242 = dma.hbm_to_vmem [thread:$0]  %s235, 512, %s237, %s223, 128, 128, 8
        $region24: #{tpu_custom_call.1} parent=15 // pred_fallthru
          _
        // Predicated region
        $region25: #{tpu_custom_call.1} parent=15 // pred_check
          %p243 = pneg %p123
        $region26: #{tpu_custom_call.1} parent=15 // pred_check_branch
          %245 = sbr.rel (%p243) target = $region28
        $region27: #{tpu_custom_call.1} parent=15 // pred_region
          %s246 = sadd.s32 %s28, %s29
          %s247 = smul.u32 4, %s246
          %p248 = scmp.lt.s32.totalorder %s27, 1
          %s249 = scalar_select %p248, %s27, 1
          %p250 = scmp.lt.s32.totalorder %s247, 3
          %s251 = scalar_select %p250, %s247, 3
          %s252 = smul.addr %s249, 4
          %s253 = sadd.s32 %s251, %s252
          %s254 = smul.addr %s253, 8
          %s255 = scalar_lea.vmem %s2, %s254
          %s256 = sadd.s32 %s28, %s29
          %s257 = smul.u32 4, %s256
        $region28: #{tpu_custom_call.1} parent=15 // pred_fallthru
          _
      $region16: #{tpu_custom_call.1} parent=5 // pred_fallthru
        _
      %p258 = scmp.le.s32.totalorder 1, %s20
      %p259 = scmp.lt.s32.totalorder %s20, 3
      %p260 = pnand %p258, %p259
      %p261 = pneg %p260
      // Predicated region
      $region29: #{tpu_custom_call.1} parent=5 // pred_check
        _
      $region30: #{tpu_custom_call.1} parent=5 // pred_check_branch
        %263 = sbr.rel (%p260) target = $region32
      $region31: #{tpu_custom_call.1} parent=5 // pred_region
        %s264 = ssub.s32 %s20, 1
        %s265 = sand.u32 %s86, 1
        %s266 = scalar_lea.sflag [#allocation3], %s265
        %s267 = sand.u32 %s86, 1
        %s268 = smul.addr %s267, 32
        %s269 = scalar_lea.vmem [#allocation2], %s268
        // Predicated region
        $region33: #{tpu_custom_call.1} parent=31 // pred_check
          %p270 = pneg %p99
        $region34: #{tpu_custom_call.1} parent=31 // pred_check_branch
          %272 = sbr.rel (%p270) target = $region36
        $region35: #{tpu_custom_call.1} parent=31 // pred_region
          %273 = dma.done %s266, 512
        $region36: #{tpu_custom_call.1} parent=31 // pred_fallthru
          _
        %s274 = sadd.s32 %s31, %s32
        %s275 = smul.u32 4, %s274
        %p276 = scmp.lt.s32.totalorder %s30, 1
        %s277 = scalar_select %p276, %s30, 1
        %p278 = scmp.lt.s32.totalorder %s275, 3
        %s279 = scalar_select %p278, %s275, 3
        %s280 = smul.addr %s277, 4
        %s281 = sadd.s32 %s279, %s280
        %s282 = smul.addr %s281, 8
        %s283 = scalar_lea.vmem %s0, %s282
        %p284 = pneg %p69
        %p285 = pneg %p66
        %s286 = sand.u32 %s86, 1
        %s287 = scalar_lea.sflag [#allocation3], %s286
        %s288 = sand.u32 %s86, 1
        %s289 = smul.addr %s288, 32
        %s290 = scalar_lea.vmem [#allocation2], %s289
        %p291 = pneg %p99
        %p292 = pneg %p96
        %s293 = sadd.s32 %s31, %s32
        %s294 = smul.u32 4, %s293
        %p295 = scmp.lt.s32.totalorder %s30, 1
        %s296 = scalar_select %p295, %s30, 1
        %p297 = scmp.lt.s32.totalorder %s294, 3
        %s298 = scalar_select %p297, %s294, 3
        %s299 = smul.addr %s296, 4
        %s300 = sadd.s32 %s298, %s299
        %s301 = smul.addr %s300, 8
        %s302 = scalar_lea.vmem %s2, %s301
        %p303 = pneg %p129
        %p304 = pneg %p126
        %p305 = pneg %p157
        %p306 = pneg %p154
        %s307 = sand.u32 %s144, 1
        %s308 = scalar_lea.sflag [#allocation4], %s307
        %s309 = sand.u32 %s144, 1
        %s310 = smul.addr %s309, 8
        %s311 = scalar_lea.vmem [#allocation5], %s310
        %p312 = pneg %p185
        %p313 = pneg %p182
        %s314 = sand.u32 %s172, 1
        %s315 = scalar_lea.sflag [#allocation7], %s314
        %s316 = sand.u32 %s172, 1
        %s317 = smul.addr %s316, 8
        %s318 = scalar_lea.vmem [#allocation6], %s317
        %s319 = sadd.s32 %s31, %s32
        %s320 = smul.u32 4, %s319
        %p321 = scmp.lt.s32.totalorder %s30, 1
        %s322 = scalar_select %p321, %s30, 1
        %p323 = scmp.lt.s32.totalorder %s320, 3
        %s324 = scalar_select %p323, %s320, 3
        %s325 = smul.addr %s322, 4
        %s326 = sadd.s32 %s324, %s325
        %s327 = smul.addr %s326, 8
        %s328 = scalar_lea.vmem %s0, %s327
        %s329 = sadd.s32 %s31, %s32
        %s330 = smul.u32 4, %s329
        %s331 = sadd.s32 %s31, %s32
        %s332 = smul.u32 4, %s331
        %s333 = sadd.s32 %s31, %s32
        %s334 = smul.u32 4, %s333
        %p335 = scmp.lt.s32.totalorder %s30, 1
        %s336 = scalar_select %p335, %s30, 1
        %p337 = scmp.lt.s32.totalorder %s334, 3
        %s338 = scalar_select %p337, %s334, 3
        %s339 = smul.addr %s336, 4
        %s340 = sadd.s32 %s338, %s339
        %s341 = smul.addr %s340, 8
        %s342 = scalar_lea.vmem %s2, %s341
        %s343 = sadd.s32 %s31, %s32
        %s344 = smul.u32 4, %s343
        %p345 = scmp.eq.s32.totalorder %s32, 0
        // Predicated region
        $region37: #{tpu_custom_call.1} parent=31 // pred_check
          %p346 = pneg %p345
        $region38: #{tpu_custom_call.1} parent=31 // pred_check_branch
          %348 = sbr.rel (%p346) target = $region40
        $region39: #{tpu_custom_call.1} parent=31 // pred_region
          %349 = vst [vmem:[%s311] sm:$0xff] 0.0
          %350 = vst [vmem:[%s318] sm:$0xff] 0.0
        $region40: #{tpu_custom_call.1} parent=31 // pred_fallthru
          _
        %v351 = vld [vmem:[%s328] sm:$0xff]
        %v352 = vld [vmem:[%s328 + $0x8] sm:$0xff]
        %v353 = vld [vmem:[%s328 + $0x10] sm:$0xff]
        %v354 = vld [vmem:[%s328 + $0x18] sm:$0xff]
        %v355 = vmax.f32 %v351, 0.0
        %v356 = vmax.f32 %v352, 0.0
        %v357 = vmax.f32 %v353, 0.0
        %v358 = vmax.f32 %v354, 0.0
        %v359 = vmin.f32 %v355, 10.0
        %v360 = vmin.f32 %v356, 10.0
        %v361 = vmin.f32 %v357, 10.0
        %v362 = vmin.f32 %v358, 10.0
        %v363 = vld [vmem:[%s269] sm:$0xff]
        %v364 = vld [vmem:[%s269 + $0x8] sm:$0xff]
        %v365 = vld [vmem:[%s269 + $0x10] sm:$0xff]
        %v366 = vld [vmem:[%s269 + $0x18] sm:$0xff]
        %v367 = vmax.f32 %v363, 0.0
        %v368 = vmax.f32 %v364, 0.0
        %v369 = vmax.f32 %v365, 0.0
        %v370 = vmax.f32 %v366, 0.0
        %v371 = vmin.f32 %v367, 10.0
        %v372 = vmin.f32 %v368, 10.0
        %v373 = vmin.f32 %v369, 10.0
        %v374 = vmin.f32 %v370, 10.0
        %v375 = vld [vmem:[%s342] sm:$0xff]
        %v376 = vld [vmem:[%s342 + $0x8] sm:$0xff]
        %v377 = vld [vmem:[%s342 + $0x10] sm:$0xff]
        %v378 = vld [vmem:[%s342 + $0x18] sm:$0xff]
        %vm379 = vcmp.ne.s32.totalorder %v375, 0
        %vm380 = vcmp.ne.s32.totalorder %v376, 0
        %vm381 = vcmp.ne.s32.totalorder %v377, 0
        %vm382 = vcmp.ne.s32.totalorder %v378, 0
        %v383 = vsel %vm379, 1.0, 0.0
        %v384 = vsel %vm380, 1.0, 0.0
        %v385 = vsel %vm381, 1.0, 0.0
        %v386 = vsel %vm382, 1.0, 0.0
        %v387 = vld [vmem:[%s311] sm:$0xff]
        %v388 = vsub.f32 %v359, %v371
        %v389 = vsub.f32 %v360, %v372
        %v390 = vsub.f32 %v361, %v373
        %v391 = vsub.f32 %v362, %v374
        %v392 = vand.u32 2147483647, %v388
        %v393 = vand.u32 2147483647, %v389
        %v394 = vand.u32 2147483647, %v390
        %v395 = vand.u32 2147483647, %v391
        %v396 = vmul.f32 %v392, %v383
        %v397 = vmul.f32 %v393, %v384
        %v398 = vmul.f32 %v394, %v385
        %v399 = vmul.f32 %v395, %v386
        %v400 = vadd.f32 %v396, %v397
        %v401 = vadd.f32 %v400, %v398
        %v402 = vadd.f32 %v401, %v399
        %v403 = vadd.f32 %v387, %v402
        %404 = vst [vmem:[%s311] sm:$0xff] %v403
        %v405 = vld [vmem:[%s318] sm:$0xff]
        %v406 = vadd.f32 %v383, %v384
        %v407 = vadd.f32 %v406, %v385
        %v408 = vadd.f32 %v407, %v386
        %v409 = vadd.f32 %v405, %v408
        %410 = vst [vmem:[%s318] sm:$0xff] %v409
        %s411 = sand.u32 %s144, 1
        %s412 = scalar_lea.sflag [#allocation4], %s411
        %s413 = sand.u32 %s144, 1
        %s414 = smul.addr %s413, 8
        %s415 = scalar_lea.vmem [#allocation5], %s414
        %s416 = sand.u32 %s172, 1
        %s417 = scalar_lea.sflag [#allocation7], %s416
        %s418 = sand.u32 %s172, 1
        %s419 = smul.addr %s418, 8
        %s420 = scalar_lea.vmem [#allocation6], %s419
        // Predicated region
        $region41: #{tpu_custom_call.1} parent=31 // pred_check
          %p421 = pneg %p154
        $region42: #{tpu_custom_call.1} parent=31 // pred_check_branch
          %423 = sbr.rel (%p421) target = $region44
        $region43: #{tpu_custom_call.1} parent=31 // pred_region
          %s425 = ssub.s32 128, 128
          %426 = vsyncadd %s412, %s425
          %s427 = sadd.s32 %s31, %s30
          %s428 = smul.addr %s427, 128
          %s429 = scalar_lea.hbm %s3, %s428
          %s431 = sshll.u32 %s415, 4
          %s432 = int_to_ptr.vmem [resolvable:$true] %s431
          %434 = dma.vmem_to_hbm [thread:$0]  %s432, 128, %s429, %s412
        $region44: #{tpu_custom_call.1} parent=31 // pred_fallthru
          _
        // Predicated region
        $region45: #{tpu_custom_call.1} parent=31 // pred_check
          %p435 = pneg %p182
        $region46: #{tpu_custom_call.1} parent=31 // pred_check_branch
          %437 = sbr.rel (%p435) target = $region48
        $region47: #{tpu_custom_call.1} parent=31 // pred_region
          %s439 = ssub.s32 128, 128
          %440 = vsyncadd %s417, %s439
          %s441 = sadd.s32 %s31, %s30
          %s442 = smul.addr %s441, 128
          %s443 = scalar_lea.hbm %s4, %s442
          %s445 = sshll.u32 %s420, 4
          %s446 = int_to_ptr.vmem [resolvable:$true] %s445
          %448 = dma.vmem_to_hbm [thread:$0]  %s446, 128, %s443, %s417
        $region48: #{tpu_custom_call.1} parent=31 // pred_fallthru
          _
      $region32: #{tpu_custom_call.1} parent=5 // pred_fallthru
        _
      %p449 = scmp.le.s32.totalorder 2, %s20
      // Predicated region
      $region49: #{tpu_custom_call.1} parent=5 // pred_check
        %p450 = pneg %p449
      $region50: #{tpu_custom_call.1} parent=5 // pred_check_branch
        %452 = sbr.rel (%p450) target = $region52
      $region51: #{tpu_custom_call.1} parent=5 // pred_region
        %s453 = ssub.s32 %s20, 2
        // Predicated region
        $region53: #{tpu_custom_call.1} parent=51 // pred_check
          %p454 = pneg %p160
        $region54: #{tpu_custom_call.1} parent=51 // pred_check_branch
          %456 = sbr.rel (%p454) target = $region56
        $region55: #{tpu_custom_call.1} parent=51 // pred_region
          %s457 = sand.u32 %s145, 1
          %s458 = scalar_lea.sflag [#allocation4], %s457
          %s459 = sand.u32 %s145, 1
          %s460 = smul.addr %s459, 8
          %s461 = scalar_lea.vmem [#allocation5], %s460
          %462 = dma.done %s458, 128
        $region56: #{tpu_custom_call.1} parent=51 // pred_fallthru
          _
        // Predicated region
        $region57: #{tpu_custom_call.1} parent=51 // pred_check
          %p463 = pneg %p188
        $region58: #{tpu_custom_call.1} parent=51 // pred_check_branch
          %465 = sbr.rel (%p463) target = $region60
        $region59: #{tpu_custom_call.1} parent=51 // pred_region
          %s466 = sand.u32 %s173, 1
          %s467 = scalar_lea.sflag [#allocation7], %s466
          %s468 = sand.u32 %s173, 1
          %s469 = smul.addr %s468, 8
          %s470 = scalar_lea.vmem [#allocation6], %s469
          %471 = dma.done %s467, 128
        $region60: #{tpu_custom_call.1} parent=51 // pred_fallthru
          _
      $region52: #{tpu_custom_call.1} parent=5 // pred_fallthru
        _
    $region6: #{tpu_custom_call.1} parent=1 // loop_footer
      %s24 = sadd.s32 1, %s20
    $region7: #{tpu_custom_call.1} parent=1 // loop_footer_branch
      %19 = sbr.rel target = $region3
    $region8: #{tpu_custom_call.1} parent=1 // loop_exit
      _
    %472 = vsyncpa [#allocation3], 1
    %s473 = scalar_lea.sflag [#allocation3], 1
    %474 = vsyncpa %s473, 1
    %475 = vsyncpa [#allocation4], 1
    %s476 = scalar_lea.sflag [#allocation4], 1
    %477 = vsyncpa %s476, 1
    %478 = vsyncpa [#allocation7], 1
    %s479 = scalar_lea.sflag [#allocation7], 1
    %480 = vsyncpa %s479, 1

</llo_original>
